<compile_context>
chip_gen: v5e
topology: v5e:2x2
jax: 0.10.0
libtpu: 0.0.40
codegen_flags: <defaults>
</compile_context>

<pallas_src>
import jax
import jax.numpy as jnp
from jax import lax
from jax.experimental import pallas as pl
from jax.experimental.pallas import tpu as pltpu

LN_EPS = 1e-5  # PyTorch nn.LayerNorm default


def _round_up(x, m):
    return ((x + m - 1) // m) * m


def mlpblock_packed_kernel(x_ref, wcat_ref, a_ref, c_ref, o_ref):
    # Lane-packed path: P = 128 // D original rows share one 128-lane packed row.
    # x_ref   : (tm, Dp)    packed input rows
    # wcat_ref: (Dp, 2*Dp)  [block-diag W^T | block-diag (W^T @ A)]  (fc0 + mean fused)
    # a_ref   : (Dp, Dp)    block-diag segmented averaging matrix (1/D per block)
    # c_ref   : (4, Dp)     rows = [bias, bias_mean, gamma, beta], each tiled P times
    c = c_ref[...]
    bias = c[0:1, :]
    bias_mean = c[1:2, :]
    gamma = c[2:3, :]
    beta = c[3:4, :]

    dp = x_ref.shape[1]
    # One N=2*Dp MXU matmul produces the fc0 output and its segmented mean together.
    ym = jnp.dot(x_ref[...], wcat_ref[...], preferred_element_type=jnp.float32)
    y = ym[:, :dp] + bias
    mean = ym[:, dp:] + bias_mean

    cent = y - mean
    # Segmented variance via one more matmul with the averaging matrix
    # (keeps the reduction lane-dense for the packed layout, stays on the MXU).
    var = jnp.dot(cent * cent, a_ref[...], preferred_element_type=jnp.float32)
    y_n = cent * lax.rsqrt(var + LN_EPS) * gamma + beta

    # Residual: re-read x from VMEM instead of keeping an upcast copy live.
    o_ref[...] = (x_ref[...].astype(jnp.float32) + y_n).astype(o_ref.dtype)


def mlpblock_unpacked_kernel(x_ref, wt_ref, c_ref, o_ref):
    # Unpacked path (P == 1): LayerNorm reductions go to the XLU (lane reduce),
    # which is otherwise idle -- no extra MXU work.
    # x_ref: (tm, D); wt_ref: (D, D) = W^T; c_ref: (3, D) = [bias, gamma, beta]
    c = c_ref[...]
    bias = c[0:1, :]
    gamma = c[1:2, :]
    beta = c[2:3, :]

    y = jnp.dot(x_ref[...], wt_ref[...], preferred_element_type=jnp.float32) + bias
    mean = jnp.mean(y, axis=-1, keepdims=True)
    cent = y - mean
    var = jnp.mean(cent * cent, axis=-1, keepdims=True)
    y_n = cent * lax.rsqrt(var + LN_EPS) * gamma + beta

    o_ref[...] = (x_ref[...].astype(jnp.float32) + y_n).astype(o_ref.dtype)


def mlpblock_forward(x, weight, bias, gamma, beta, *, tm_target=4096):
    """x: (B, S, D); weight: (D, D) in PyTorch (out_features, in_features) order."""
    B, S, D = x.shape
    M = B * S
    f32 = jnp.float32

    # Lane packing: if D divides 128, pack P = 128 // D rows into one 128-lane
    # packed row (lane-dense stores, full-width MXU contraction).  Else P = 1.
    packed = (D < 128 and 128 % D == 0)
    P = 128 // D if packed else 1
    Dp = P * D

    x2 = jnp.asarray(x).reshape(M, D)
    if M % P != 0:
        # Tiny pad (< P rows) only, so the packing reshape is possible; the
        # padded rows produce finite, row-independent values that are sliced off.
        x2 = jnp.pad(x2, ((0, P - (M % P)), (0, 0)))
    M_rows = x2.shape[0]
    Mp = M_rows // P
    xp = x2.reshape(Mp, Dp)

    # Row tile: large enough to amortize the ~0.35us per-step pipeline overhead,
    # clamped so (a) in+out double buffers stay within a modest VMEM budget and
    # (b) the grid keeps >= 2 steps when M allows (v7x has 2 TensorCores).
    io_budget = 16 << 20
    tm_cap = max(8, ((io_budget // (4 * 4 * Dp)) // 8) * 8)
    tm = min(_round_up(tm_target, 8), tm_cap)
    tm = min(tm, max(8, _round_up(pl.cdiv(Mp, 2), 8)))
    grid = pl.cdiv(Mp, tm)  # partial last block is fine; OOB writes are dropped

    if packed:
        eye_p = jnp.eye(P, dtype=f32)
        wt = jnp.asarray(weight, f32).T                            # y = x @ W^T
        w_big = jnp.kron(eye_p, wt)                                # (Dp, Dp) block-diag W^T
        a_seg = jnp.kron(eye_p, jnp.full((D, D), 1.0 / D, f32))    # segmented mean matrix
        w_cat = jnp.concatenate([w_big, w_big @ a_seg], axis=1)    # (Dp, 2*Dp) fused fc0+mean
        bias_t = jnp.tile(jnp.asarray(bias, f32), P)
        consts = jnp.stack([
            bias_t,
            bias_t @ a_seg,
            jnp.tile(jnp.asarray(gamma, f32), P),
            jnp.tile(jnp.asarray(beta, f32), P),
        ], axis=0)                                                 # (4, Dp)
        operands = (xp, w_cat, a_seg, consts)
        in_specs = [
            pl.BlockSpec((tm, Dp), lambda i: (i, 0)),        # packed x rows
            pl.BlockSpec((Dp, 2 * Dp), lambda i: (0, 0)),    # fused weights (resident)
            pl.BlockSpec((Dp, Dp), lambda i: (0, 0)),        # averaging matrix (resident)
            pl.BlockSpec((4, Dp), lambda i: (0, 0)),         # bias / bias_mean / gamma / beta
        ]
        kernel = mlpblock_packed_kernel
        resident_bytes = 2 * 4 * (w_cat.size + a_seg.size + consts.size)
    else:
        wt = jnp.asarray(weight, f32).T
        consts = jnp.stack([
            jnp.asarray(bias, f32),
            jnp.asarray(gamma, f32),
            jnp.asarray(beta, f32),
        ], axis=0)                                                 # (3, D)
        operands = (xp, wt, consts)
        in_specs = [
            pl.BlockSpec((tm, Dp), lambda i: (i, 0)),        # x rows
            pl.BlockSpec((Dp, Dp), lambda i: (0, 0)),        # W^T (resident)
            pl.BlockSpec((3, Dp), lambda i: (0, 0)),         # bias / gamma / beta
        ]
        kernel = mlpblock_unpacked_kernel
        resident_bytes = 2 * 4 * (wt.size + consts.size)

    # VMEM: double-buffered in/out tiles + resident operands + headroom,
    # right-sized (kept well under v7x's 64 MiB physical / 32 MiB scoped VMEM).
    io_bytes = 2 * 2 * tm * Dp * 4
    vmem_limit = int(min(max(io_bytes + resident_bytes + (4 << 20), 16 << 20), 32 << 20))

    out = pl.pallas_call(
        kernel,
        out_shape=jax.ShapeDtypeStruct((Mp, Dp), x.dtype),
        grid_spec=pltpu.PrefetchScalarGridSpec(
            num_scalar_prefetch=0,
            grid=(grid,),
            in_specs=in_specs,
            out_specs=pl.BlockSpec((tm, Dp), lambda i: (i, 0)),
        ),
        compiler_params=pltpu.CompilerParams(
            dimension_semantics=("parallel",),
            vmem_limit_bytes=vmem_limit),
    )(*operands)

    out = out.reshape(M_rows, D)[:M]
    return out.reshape(B, S, D)


def reference_forward(x, weight, bias, gamma, beta):
    y = jnp.einsum("bsd,od->bso", x, weight) + bias
    mean = jnp.mean(y, axis=-1, keepdims=True)
    var = jnp.mean((y - mean) ** 2, axis=-1, keepdims=True)
    y_n = (y - mean) / jnp.sqrt(var + LN_EPS) * gamma + beta
    return x + y_n


if __name__ == "__main__":
    key = jax.random.PRNGKey(0)

    def make_case(k, B, S, D, nontrivial_affine=False):
        k_x, k_w, k_g, k_b = jax.random.split(k, 4)
        x = jax.random.normal(k_x, (B, S, D), dtype=jnp.float32)
        # reset_parameters(): xavier_uniform_(weight, gain=1e-8), bias = 0
        gain = 1e-8
        bound = gain * (6.0 / (D + D)) ** 0.5
        weight = jax.random.uniform(k_w, (D, D), dtype=jnp.float32,
                                    minval=-bound, maxval=bound)
        bias = jnp.zeros((D,), dtype=jnp.float32)
        if nontrivial_affine:
            gamma = 1.0 + 0.1 * jax.random.normal(k_g, (D,), dtype=jnp.float32)
            beta = 0.1 * jax.random.normal(k_b, (D,), dtype=jnp.float32)
        else:
            gamma = jnp.ones((D,), dtype=jnp.float32)   # LayerNorm default affine init
            beta = jnp.zeros((D,), dtype=jnp.float32)
        return x, weight, bias, gamma, beta

    k1, k2, k3 = jax.random.split(key, 3)

    # Case 1: shapes implied by the module (dims=32): B=2, S=8, D=32 (packed path).
    x, w, b, g, be = make_case(k1, 2, 8, 32)
    out = jax.block_until_ready(mlpblock_forward(x, w, b, g, be))
    ref = reference_forward(x, w, b, g, be)
    assert out.shape == x.shape
    assert jnp.allclose(out, ref, atol=1e-5, rtol=1e-5)

    # Case 2: ragged packed-row count -> multi-step grid with a partial last block.
    x, w, b, g, be = make_case(k2, 2, 50, 32, nontrivial_affine=True)
    out = jax.block_until_ready(mlpblock_forward(x, w, b, g, be))
    ref = reference_forward(x, w, b, g, be)
    assert out.shape == x.shape
    assert jnp.allclose(out, ref, atol=1e-5, rtol=1e-5)

    # Case 3: D=128 exercises the unpacked (XLU-reduction) kernel.
    x, w, b, g, be = make_case(k3, 2, 8, 128, nontrivial_affine=True)
    out = jax.block_until_ready(mlpblock_forward(x, w, b, g, be))
    ref = reference_forward(x, w, b, g, be)
    assert out.shape == x.shape
    assert jnp.allclose(out, ref, atol=1e-5, rtol=1e-5)

    print("KERNEL_OK")
</pallas_src>

<mosaic_0001>
module attributes {stable_mosaic.version = 11 : i64} {
  func.func @mlpblock_packed_kernel(%arg0: i32, %arg1: memref<8x128xf32, #tpu.memory_space<vmem>>, %arg2: memref<128x256xf32, #tpu.memory_space<vmem>>, %arg3: memref<128x128xf32, #tpu.memory_space<vmem>>, %arg4: memref<4x128xf32, #tpu.memory_space<vmem>>, %arg5: memref<8x128xf32, #tpu.memory_space<vmem>>) attributes {dimension_semantics = [#tpu.dimension_semantics<parallel>], iteration_bounds = array<i64: 1>, scalar_prefetch = 0 : i64, scratch_operands = 0 : i64, tpu.core_type = #tpu.core_type<tc>, window_params = [{transform_indices = @transform_0, window_bounds = array<i64: 8, 128>}, {pipeline_mode = #tpu.pipeline_mode<synchronous>, transform_indices = @transform_1, window_bounds = array<i64: 128, 256>}, {pipeline_mode = #tpu.pipeline_mode<synchronous>, transform_indices = @transform_2, window_bounds = array<i64: 128, 128>}, {pipeline_mode = #tpu.pipeline_mode<synchronous>, transform_indices = @transform_3, window_bounds = array<i64: 4, 128>}, {transform_indices = @transform_4, window_bounds = array<i64: 8, 128>}]} {
    %c0 = arith.constant 0 : index
    %c0_0 = arith.constant 0 : index
    %0 = vector.load %arg4[%c0, %c0_0] : memref<4x128xf32, #tpu.memory_space<vmem>>, vector<4x128xf32>
    %1 = vector.extract_strided_slice %0 {offsets = [0, 0], sizes = [1, 128], strides = [1, 1]} : vector<4x128xf32> to vector<1x128xf32>
    %2 = vector.extract_strided_slice %0 {offsets = [1, 0], sizes = [1, 128], strides = [1, 1]} : vector<4x128xf32> to vector<1x128xf32>
    %3 = vector.extract_strided_slice %0 {offsets = [2, 0], sizes = [1, 128], strides = [1, 1]} : vector<4x128xf32> to vector<1x128xf32>
    %4 = vector.extract_strided_slice %0 {offsets = [3, 0], sizes = [1, 128], strides = [1, 1]} : vector<4x128xf32> to vector<1x128xf32>
    %c0_1 = arith.constant 0 : index
    %c0_2 = arith.constant 0 : index
    %5 = vector.load %arg1[%c0_1, %c0_2] : memref<8x128xf32, #tpu.memory_space<vmem>>, vector<8x128xf32>
    %c0_3 = arith.constant 0 : index
    %c0_4 = arith.constant 0 : index
    %6 = vector.load %arg2[%c0_3, %c0_4] : memref<128x256xf32, #tpu.memory_space<vmem>>, vector<128x256xf32>
    %cst = arith.constant dense<0.000000e+00> : vector<8x256xf32>
    %7 = tpu.matmul %5, %6, %cst {dimension_numbers = #tpu.dot_dimension_numbers<[1], [0], [0], [1], [0, 0, 1, 1], [], []>} : vector<8x128xf32>, vector<128x256xf32>, vector<8x256xf32> -> vector<8x256xf32>
    %8 = vector.extract_strided_slice %7 {offsets = [0, 0], sizes = [8, 128], strides = [1, 1]} : vector<8x256xf32> to vector<8x128xf32>
    %9 = vector.broadcast %1 : vector<1x128xf32> to vector<8x128xf32>
    %10 = arith.addf %8, %9 : vector<8x128xf32>
    %11 = vector.extract_strided_slice %7 {offsets = [0, 128], sizes = [8, 128], strides = [1, 1]} : vector<8x256xf32> to vector<8x128xf32>
    %12 = vector.broadcast %2 : vector<1x128xf32> to vector<8x128xf32>
    %13 = arith.addf %11, %12 : vector<8x128xf32>
    %14 = arith.subf %10, %13 : vector<8x128xf32>
    %15 = arith.mulf %14, %14 : vector<8x128xf32>
    %c0_5 = arith.constant 0 : index
    %c0_6 = arith.constant 0 : index
    %16 = vector.load %arg3[%c0_5, %c0_6] : memref<128x128xf32, #tpu.memory_space<vmem>>, vector<128x128xf32>
    %cst_7 = arith.constant dense<0.000000e+00> : vector<8x128xf32>
    %17 = tpu.matmul %15, %16, %cst_7 {dimension_numbers = #tpu.dot_dimension_numbers<[1], [0], [0], [1], [0, 0, 1, 1], [], []>} : vector<8x128xf32>, vector<128x128xf32>, vector<8x128xf32> -> vector<8x128xf32>
    %cst_8 = arith.constant 9.99999974E-6 : f32
    %18 = vector.broadcast %cst_8 : f32 to vector<8x128xf32>
    %19 = arith.addf %17, %18 : vector<8x128xf32>
    %20 = math.rsqrt %19 : vector<8x128xf32>
    %21 = arith.mulf %14, %20 : vector<8x128xf32>
    %22 = vector.broadcast %3 : vector<1x128xf32> to vector<8x128xf32>
    %23 = arith.mulf %21, %22 : vector<8x128xf32>
    %24 = vector.broadcast %4 : vector<1x128xf32> to vector<8x128xf32>
    %25 = arith.addf %23, %24 : vector<8x128xf32>
    %c0_9 = arith.constant 0 : index
    %c0_10 = arith.constant 0 : index
    %26 = vector.load %arg1[%c0_9, %c0_10] : memref<8x128xf32, #tpu.memory_space<vmem>>, vector<8x128xf32>
    %27 = arith.addf %26, %25 : vector<8x128xf32>
    %c0_11 = arith.constant 0 : index
    %c0_12 = arith.constant 0 : index
    %28 = vector.load %arg5[%c0_11, %c0_12] : memref<8x128xf32, #tpu.memory_space<vmem>>, vector<8x128xf32>
    tpu.vector_store %arg5[%c0_11, %c0_12], %27 {strides = array<i32>} : memref<8x128xf32, #tpu.memory_space<vmem>>, vector<8x128xf32>,
    return
  }
  func.func @transform_0(%arg0: i32) -> (i32, i32) {
    %c0_i32 = arith.constant 0 : i32
    %c0_i32_0 = arith.constant 0 : i32
    return %arg0, %c0_i32 : i32, i32
  }
  func.func @transform_1(%arg0: i32) -> (i32, i32) {
    %c0_i32 = arith.constant 0 : i32
    %c0_i32_0 = arith.constant 0 : i32
    %c0_i32_1 = arith.constant 0 : i32
    return %c0_i32, %c0_i32_0 : i32, i32
  }
  func.func @transform_2(%arg0: i32) -> (i32, i32) {
    %c0_i32 = arith.constant 0 : i32
    %c0_i32_0 = arith.constant 0 : i32
    %c0_i32_1 = arith.constant 0 : i32
    return %c0_i32, %c0_i32_0 : i32, i32
  }
  func.func @transform_3(%arg0: i32) -> (i32, i32) {
    %c0_i32 = arith.constant 0 : i32
    %c0_i32_0 = arith.constant 0 : i32
    %c0_i32_1 = arith.constant 0 : i32
    return %c0_i32, %c0_i32_0 : i32, i32
  }
  func.func @transform_4(%arg0: i32) -> (i32, i32) {
    %c0_i32 = arith.constant 0 : i32
    %c0_i32_0 = arith.constant 0 : i32
    return %arg0, %c0_i32 : i32, i32
  }
}

</mosaic_0001>

<llo_original>
// kernel: tpu_custom_call.1
$region0: #{tpu_custom_call.1}
  #allocation0 [shape = 'u32[]', space=smem, size = 0x4, offset = 0x4, fixed_abs, tag = 'smem constant byte address 0x4 - core index']
  #allocation1 [shape = 'u32[72,128]{1,0:T(1,128)}', space=vmem, size = 0x9000, scoped, tag = 'internal scratch']
  %s0 = inlined_call_operand.hbm [shape: f32[4,128], index: 0, kind: input, shape index: {}]
  %s1 = inlined_call_operand.hbm [shape: f32[128,256], index: 1, kind: input, shape index: {}]
  %s2 = inlined_call_operand.hbm [shape: f32[128,128], index: 2, kind: input, shape index: {}]
  %s3 = inlined_call_operand.hbm [shape: f32[4,128], index: 3, kind: input, shape index: {}]
  %s4 = inlined_call_operand.hbm [shape: f32[4,128], index: 4, kind: output, shape index: {}]
  %s5 = sld [smem:[#allocation0]]
  $region42: #{tpu_custom_call.1} parent=0
    _
  %s7 = ssub.s32 1, %s5
  %s8 = scalar_select 0, %s7, %s5
  $region1: #{tpu_custom_call.1} parent=0
    #allocation2 [shape = 'u8[4096]{0}', space=vmem, size = 0x1000, scoped, tag = 'input window, operand 0, single buffered']
    #allocation3 [shape = 's32[1]{0}', space=sflag, size = 0x4, scoped, tag = 'scoped memory for tpu_custom_call.1']
    #allocation4 [shape = 's32[1]{0}', space=sflag, size = 0x4, scoped, tag = 'scoped memory for tpu_custom_call.1']
    #allocation5 [shape = 'u8[131072]{0}', space=vmem, size = 0x20000, scoped, tag = 'input window, operand 1, single buffered']
    #allocation6 [shape = 's32[1]{0}', space=sflag, size = 0x4, scoped, tag = 'scoped memory for tpu_custom_call.1']
    #allocation7 [shape = 'u8[65536]{0}', space=vmem, size = 0x10000, scoped, tag = 'input window, operand 2, single buffered']
    #allocation8 [shape = 'u8[2048]{0}', space=vmem, size = 0x800, scoped, tag = 'input window, operand 3, single buffered']
    #allocation9 [shape = 's32[1]{0}', space=sflag, size = 0x4, scoped, tag = 'scoped memory for tpu_custom_call.1']
    #allocation10 [shape = 'u8[4096]{0}', space=vmem, size = 0x1000, scoped, tag = 'output window, operand 0, single buffered']
    %9 = vsyncpa [#allocation3], 0
    %10 = vsyncpa [#allocation6], 0
    %11 = vsyncpa [#allocation9], 0
    %12 = vsyncpa [#allocation4], 0
    // Predicated region
    $region2: #{tpu_custom_call.1} parent=1 // pred_check
      _
    $region3: #{tpu_custom_call.1} parent=1 // pred_check_branch
      %14 = sbr.rel (0) target = $region5
    $region4: #{tpu_custom_call.1} parent=1 // pred_region
      %16 = vsyncadd [#allocation3], 64
      %s17 = sshll.u32 %s0, 4
      %s18 = int_to_ptr.hbm [resolvable:$true] %s17
      %s19 = sshll.u32 [#allocation2], 4
      %s20 = int_to_ptr.vmem [resolvable:$true] %s19
      %25 = dma.hbm_to_vmem [thread:$0]  %s18, 64, %s20, [#allocation3], 64, 64, 4
    $region5: #{tpu_custom_call.1} parent=1 // pred_fallthru
      _
    // Predicated region
    $region6: #{tpu_custom_call.1} parent=1 // pred_check
      _
    $region7: #{tpu_custom_call.1} parent=1 // pred_check_branch
      %27 = sbr.rel (0) target = $region9
    $region8: #{tpu_custom_call.1} parent=1 // pred_region
      %29 = vsyncadd [#allocation6], 0
      %s30 = sshll.u32 %s1, 4
      %s31 = int_to_ptr.hbm [resolvable:$true] %s30
      %s32 = sshll.u32 [#allocation5], 4
      %s33 = int_to_ptr.vmem [resolvable:$true] %s32
      %38 = dma.hbm_to_vmem [thread:$0]  %s31, 4096, %s33, [#allocation6], 256, 256, 16
    $region9: #{tpu_custom_call.1} parent=1 // pred_fallthru
      _
    // Predicated region
    $region10: #{tpu_custom_call.1} parent=1 // pred_check
      _
    $region11: #{tpu_custom_call.1} parent=1 // pred_check_branch
      %40 = sbr.rel (0) target = $region13
    $region12: #{tpu_custom_call.1} parent=1 // pred_region
      %42 = vsyncadd [#allocation6], 0
      %s43 = sshll.u32 %s2, 4
      %s44 = int_to_ptr.hbm [resolvable:$true] %s43
      %s45 = sshll.u32 [#allocation7], 4
      %s46 = int_to_ptr.vmem [resolvable:$true] %s45
      %51 = dma.hbm_to_vmem [thread:$0]  %s44, 2048, %s46, [#allocation6], 128, 128, 8
    $region13: #{tpu_custom_call.1} parent=1 // pred_fallthru
      _
    // Predicated region
    $region14: #{tpu_custom_call.1} parent=1 // pred_check
      _
    $region15: #{tpu_custom_call.1} parent=1 // pred_check_branch
      %53 = sbr.rel (0) target = $region17
    $region16: #{tpu_custom_call.1} parent=1 // pred_region
      %55 = vsyncadd [#allocation9], 0
      %s57 = sshll.u32 %s3, 4
      %s58 = int_to_ptr.hbm [resolvable:$true] %s57
      %s59 = sshll.u32 [#allocation8], 4
      %s60 = int_to_ptr.vmem [resolvable:$true] %s59
      %62 = dma.hbm_to_vmem [thread:$0]  %s58, 64, %s60, [#allocation9]
    $region17: #{tpu_custom_call.1} parent=1 // pred_fallthru
      _
    // Predicated region
    $region18: #{tpu_custom_call.1} parent=1 // pred_check
      _
    $region19: #{tpu_custom_call.1} parent=1 // pred_check_branch
      %64 = sbr.rel (0) target = $region21
    $region20: #{tpu_custom_call.1} parent=1 // pred_region
      %66 = dma.done [#allocation3], 128
    $region21: #{tpu_custom_call.1} parent=1 // pred_fallthru
      _
    // Predicated region
    $region22: #{tpu_custom_call.1} parent=1 // pred_check
      _
    $region23: #{tpu_custom_call.1} parent=1 // pred_check_branch
      %68 = sbr.rel (0) target = $region25
    $region24: #{tpu_custom_call.1} parent=1 // pred_region
      %70 = dma.done [#allocation6], 4096
    $region25: #{tpu_custom_call.1} parent=1 // pred_fallthru
      _
    // Predicated region
    $region26: #{tpu_custom_call.1} parent=1 // pred_check
      _
    $region27: #{tpu_custom_call.1} parent=1 // pred_check_branch
      %72 = sbr.rel (0) target = $region29
    $region28: #{tpu_custom_call.1} parent=1 // pred_region
      %74 = dma.done [#allocation6], 2048
    $region29: #{tpu_custom_call.1} parent=1 // pred_fallthru
      _
    // Predicated region
    $region30: #{tpu_custom_call.1} parent=1 // pred_check
      _
    $region31: #{tpu_custom_call.1} parent=1 // pred_check_branch
      %76 = sbr.rel (0) target = $region33
    $region32: #{tpu_custom_call.1} parent=1 // pred_region
      %78 = dma.done [#allocation9], 64
    $region33: #{tpu_custom_call.1} parent=1 // pred_fallthru
      _
    %v79 = vld [vmem:[#allocation8] sm:$0xf]
    %v80 = vld [vmem:[#allocation2] sm:$0xff]
    %v81 = vld [vmem:[#allocation5] sm:$0xff]
    %v82 = vld [vmem:[#allocation5 + $0x8] sm:$0xff]
    %v83 = vld [vmem:[#allocation5 + $0x10] sm:$0xff]
    %v84 = vld [vmem:[#allocation5 + $0x18] sm:$0xff]
    %v85 = vld [vmem:[#allocation5 + $0x20] sm:$0xff]
    %v86 = vld [vmem:[#allocation5 + $0x28] sm:$0xff]
    %v87 = vld [vmem:[#allocation5 + $0x30] sm:$0xff]
    %v88 = vld [vmem:[#allocation5 + $0x38] sm:$0xff]
    %v89 = vld [vmem:[#allocation5 + $0x40] sm:$0xff]
    %v90 = vld [vmem:[#allocation5 + $0x48] sm:$0xff]
    %v91 = vld [vmem:[#allocation5 + $0x50] sm:$0xff]
    %v92 = vld [vmem:[#allocation5 + $0x58] sm:$0xff]
    %v93 = vld [vmem:[#allocation5 + $0x60] sm:$0xff]
    %v94 = vld [vmem:[#allocation5 + $0x68] sm:$0xff]
    %v95 = vld [vmem:[#allocation5 + $0x70] sm:$0xff]
    %v96 = vld [vmem:[#allocation5 + $0x78] sm:$0xff]
    %v97 = vld [vmem:[#allocation5 + $0x80] sm:$0xff]
    %v98 = vld [vmem:[#allocation5 + $0x88] sm:$0xff]
    %v99 = vld [vmem:[#allocation5 + $0x90] sm:$0xff]
    %v100 = vld [vmem:[#allocation5 + $0x98] sm:$0xff]
    %v101 = vld [vmem:[#allocation5 + $0xa0] sm:$0xff]
    %v102 = vld [vmem:[#allocation5 + $0xa8] sm:$0xff]
    %v103 = vld [vmem:[#allocation5 + $0xb0] sm:$0xff]
    %v104 = vld [vmem:[#allocation5 + $0xb8] sm:$0xff]
    %v105 = vld [vmem:[#allocation5 + $0xc0] sm:$0xff]
    %v106 = vld [vmem:[#allocation5 + $0xc8] sm:$0xff]
    %v107 = vld [vmem:[#allocation5 + $0xd0] sm:$0xff]
    %v108 = vld [vmem:[#allocation5 + $0xd8] sm:$0xff]
    %v109 = vld [vmem:[#allocation5 + $0xe0] sm:$0xff]
    %v110 = vld [vmem:[#allocation5 + $0xe8] sm:$0xff]
    %v111 = vld [vmem:[#allocation5 + $0xf0] sm:$0xff]
    %v112 = vld [vmem:[#allocation5 + $0xf8] sm:$0xff]
    %113 = vmatpush.msra.mxu0 %v111
    %114 = vmatpush.msra.mxu0 %v109
    %115 = vmatpush.msra.mxu0 %v107
    %116 = vmatpush.msra.mxu0 %v105
    %117 = vmatpush.msra.mxu0 %v103
    %118 = vmatpush.msra.mxu0 %v101
    %119 = vmatpush.msra.mxu0 %v99
    %120 = vmatpush.msra.mxu0 %v97
    %121 = vmatpush.msra.mxu0 %v95
    %122 = vmatpush.msra.mxu0 %v93
    %123 = vmatpush.msra.mxu0 %v91
    %124 = vmatpush.msra.mxu0 %v89
    %125 = vmatpush.msra.mxu0 %v87
    %126 = vmatpush.msra.mxu0 %v85
    %127 = vmatpush.msra.mxu0 %v83
    %128 = vmatpush.msra.mxu0 %v81
    %129 = vmatmul.f32.gmra.mxu0 %v80
    %v130 = vpop.f32.mrf.mxu0
    %v131 = vadd.f32 0.0, %v130
    %132 = vdwg.mxu0
    %133 = vmatpush.msra.mxu0 %v112
    %134 = vmatpush.msra.mxu0 %v110
    %135 = vmatpush.msra.mxu0 %v108
    %136 = vmatpush.msra.mxu0 %v106
    %137 = vmatpush.msra.mxu0 %v104
    %138 = vmatpush.msra.mxu0 %v102
    %139 = vmatpush.msra.mxu0 %v100
    %140 = vmatpush.msra.mxu0 %v98
    %141 = vmatpush.msra.mxu0 %v96
    %142 = vmatpush.msra.mxu0 %v94
    %143 = vmatpush.msra.mxu0 %v92
    %144 = vmatpush.msra.mxu0 %v90
    %145 = vmatpush.msra.mxu0 %v88
    %146 = vmatpush.msra.mxu0 %v86
    %147 = vmatpush.msra.mxu0 %v84
    %148 = vmatpush.msra.mxu0 %v82
    %149 = vmatmul.f32.gmra.mxu0 %v80
    %v150 = vpop.f32.mrf.mxu0
    %v151 = vadd.f32 0.0, %v150
    %152 = vdwg.mxu0
    %v153 = vperm.slane %v79, 0
    %v154 = vadd.f32 %v131, %v153
    %v155 = vperm.slane %v79, 1
    %v156 = vadd.f32 %v151, %v155
    %v157 = vsub.f32 %v154, %v156
    %v158 = vmul.f32 %v157, %v157
    %v159 = vld [vmem:[#allocation7] sm:$0xff]
    %v160 = vld [vmem:[#allocation7 + $0x8] sm:$0xff]
    %v161 = vld [vmem:[#allocation7 + $0x10] sm:$0xff]
    %v162 = vld [vmem:[#allocation7 + $0x18] sm:$0xff]
    %v163 = vld [vmem:[#allocation7 + $0x20] sm:$0xff]
    %v164 = vld [vmem:[#allocation7 + $0x28] sm:$0xff]
    %v165 = vld [vmem:[#allocation7 + $0x30] sm:$0xff]
    %v166 = vld [vmem:[#allocation7 + $0x38] sm:$0xff]
    %v167 = vld [vmem:[#allocation7 + $0x40] sm:$0xff]
    %v168 = vld [vmem:[#allocation7 + $0x48] sm:$0xff]
    %v169 = vld [vmem:[#allocation7 + $0x50] sm:$0xff]
    %v170 = vld [vmem:[#allocation7 + $0x58] sm:$0xff]
    %v171 = vld [vmem:[#allocation7 + $0x60] sm:$0xff]
    %v172 = vld [vmem:[#allocation7 + $0x68] sm:$0xff]
    %v173 = vld [vmem:[#allocation7 + $0x70] sm:$0xff]
    %v174 = vld [vmem:[#allocation7 + $0x78] sm:$0xff]
    %175 = vmatpush.msra.mxu0 %v174
    %176 = vmatpush.msra.mxu0 %v173
    %177 = vmatpush.msra.mxu0 %v172
    %178 = vmatpush.msra.mxu0 %v171
    %179 = vmatpush.msra.mxu0 %v170
    %180 = vmatpush.msra.mxu0 %v169
    %181 = vmatpush.msra.mxu0 %v168
    %182 = vmatpush.msra.mxu0 %v167
    %183 = vmatpush.msra.mxu0 %v166
    %184 = vmatpush.msra.mxu0 %v165
    %185 = vmatpush.msra.mxu0 %v164
    %186 = vmatpush.msra.mxu0 %v163
    %187 = vmatpush.msra.mxu0 %v162
    %188 = vmatpush.msra.mxu0 %v161
    %189 = vmatpush.msra.mxu0 %v160
    %190 = vmatpush.msra.mxu0 %v159
    %191 = vmatmul.f32.gmra.mxu0 %v158
    %v192 = vpop.f32.mrf.mxu0
    %v193 = vadd.f32 1e-05, %v192
    %194 = vdwg.mxu0
    %v195 = vrsqrt.pop %v193
    %v196 = vmul.f32 %v195, %v193
    %v197 = vmul.f32 %v196, %v195
    %v198 = vmul.f32 0.5, %v197
    %v199 = vsub.f32 1.5, %v198
    %v200 = vmul.f32 %v195, %v199
    %vm201 = vweird.f32 %v193
    %vm202 = vweird.f32 %v195
    %vm203 = vmor %vm201, %vm202
    %v204 = vsel %vm203, %v195, %v200
    %v205 = vmul.f32 %v157, %v204
    %v206 = vperm.slane %v79, 2
    %v207 = vmul.f32 %v205, %v206
    %v208 = vperm.slane %v79, 3
    %v209 = vadd.f32 %v207, %v208
    %v210 = vadd.f32 %v80, %v209
    %211 = vst [vmem:[#allocation10] sm:$0xff] %v210
    // Predicated region
    $region34: #{tpu_custom_call.1} parent=1 // pred_check
      _
    $region35: #{tpu_custom_call.1} parent=1 // pred_check_branch
      %213 = sbr.rel (0) target = $region37
    $region36: #{tpu_custom_call.1} parent=1 // pred_region
      %215 = vsyncadd [#allocation4], 64
      %s216 = sshll.u32 [#allocation10], 4
      %s217 = int_to_ptr.vmem [resolvable:$true] %s216
      %s218 = sshll.u32 %s4, 4
      %s219 = int_to_ptr.hbm [resolvable:$true] %s218
      %224 = dma.vmem_to_hbm [thread:$0]  %s217, 64, %s219, [#allocation4], 64, 64, 4
    $region37: #{tpu_custom_call.1} parent=1 // pred_fallthru
      _
    // Predicated region
    $region38: #{tpu_custom_call.1} parent=1 // pred_check
      _
    $region39: #{tpu_custom_call.1} parent=1 // pred_check_branch
      %226 = sbr.rel (0) target = $region41
    $region40: #{tpu_custom_call.1} parent=1 // pred_region
      %228 = dma.done [#allocation4], 128
    $region41: #{tpu_custom_call.1} parent=1 // pred_fallthru
      _
    %229 = vsyncpa [#allocation3], 1
    %230 = vsyncpa [#allocation6], 1
    %231 = vsyncpa [#allocation9], 1
    %232 = vsyncpa [#allocation4], 1

</llo_original>
